<compile_context>
chip_gen: v6e
topology: v6e:2x2x1
jax: 0.10.0
libtpu: 0.0.40
codegen_flags: <defaults>
</compile_context>

<pallas_src>
import functools

import jax
import jax.numpy as jnp
from jax import lax
from jax.experimental import pallas as pl
from jax.experimental.pallas import tpu as pltpu


# ----------------------------------------------------------------------------
# VMEM sizing (generation-aware).
# ----------------------------------------------------------------------------
def _vmem_budget():
    try:
        cap = int(pltpu.get_tpu_info().vmem_capacity_bytes)
    except Exception:
        cap = 64 * 1024 * 1024          # conservative (v7x per-TC) fallback
    tile_budget = int(cap * 0.60)       # streamed tiles + resident blocks
    vmem_limit = int(cap * 0.90)        # headroom for compiler-internal scratch
    return tile_budget, vmem_limit


def _flatten_feats(x):
    """NCHW -> (N, K) row-major feature matrix, matching torch .view()."""
    a, b, c, d = x.shape
    N = a * b
    K = c * d
    if x.dtype not in (jnp.float32, jnp.bfloat16):
        x = x.astype(jnp.float32)
    feats = x.reshape(N, K)             # contiguous view; no data movement
    inv_total = 1.0 / float(a * b * c * d)
    return feats, N, K, inv_total


def _pick_tile(N, K, itemsize, resident_bytes, tile_budget):
    """Largest K tile that fits the VMEM budget next to the resident blocks.

    Streamed F tile is double-buffered by the Pallas pipeline:
        2 * N * tk * itemsize + resident_bytes <= tile_budget
    """
    avail = max(tile_budget - resident_bytes, 256 * 1024)
    max_tk = max(avail // (2 * N * itemsize), 128)
    if K <= max_tk:
        return K                        # one full-width block: no masking, 1 step
    tk = (max_tk // 512) * 512          # MXU/DMA-friendly granularity
    if tk == 0:
        tk = max((max_tk // 128) * 128, 128)
    return int(tk)


def _mask_ragged(blk, k_step, tk, K):
    """Zero the out-of-range columns of the (ragged) last K tile."""
    col = lax.broadcasted_iota(jnp.int32, blk.shape, 1) + k_step * tk
    return jnp.where(col < K, blk, jnp.zeros_like(blk))


# ----------------------------------------------------------------------------
# Standalone Gram kernel: G = (F @ F.T) / (a*b*c*d)
# Accumulates directly into the resident f32 output block (no scratch).
# ----------------------------------------------------------------------------
def _gram_kernel(f_ref, g_ref, *, inv_total, K, tk):
    k = pl.program_id(0)

    @pl.when(k == 0)
    def _():
        g_ref[...] = jnp.zeros_like(g_ref)

    blk = f_ref[...]                    # (N, tk), native dtype
    if K % tk != 0:                     # compile-time guard: ragged last tile only
        blk = _mask_ragged(blk, k, tk, K)

    g_ref[...] += lax.dot_general(      # NT contraction: no input transpose
        blk, blk,
        dimension_numbers=(((1,), (1,)), ((), ())),
        preferred_element_type=jnp.float32,
    )

    @pl.when(k == pl.num_programs(0) - 1)
    def _():
        g_ref[...] = g_ref[...] * inv_total


def gram_matrix(x: jax.Array) -> jax.Array:
    feats, N, K, inv_total = _flatten_feats(x)
    tile_budget, vmem_limit = _vmem_budget()
    resident = 2 * N * N * 4            # resident (N, N) f32 output block
    tk = _pick_tile(N, K, feats.dtype.itemsize, resident, tile_budget)

    kernel = functools.partial(_gram_kernel, inv_total=inv_total, K=K, tk=tk)
    return pl.pallas_call(
        kernel,
        out_shape=jax.ShapeDtypeStruct((N, N), jnp.float32),
        grid_spec=pltpu.PrefetchScalarGridSpec(
            num_scalar_prefetch=0,
            grid=(pl.cdiv(K, tk),),
            in_specs=[pl.BlockSpec((N, tk), lambda k: (0, k))],
            out_specs=pl.BlockSpec((N, N), lambda k: (0, 0)),
        ),
        compiler_params=pltpu.CompilerParams(
            dimension_semantics=("arbitrary",),
            vmem_limit_bytes=vmem_limit,
        ),
    )(feats)


# ----------------------------------------------------------------------------
# Fused Gram + MSE kernel (forward hot path).
# ----------------------------------------------------------------------------
def _gram_mse_kernel(f_ref, t_ref, loss_ref, acc_ref, *, inv_total, inv_n2, K, tk):
    k = pl.program_id(0)

    @pl.when(k == 0)
    def _():
        acc_ref[...] = jnp.zeros_like(acc_ref)

    blk = f_ref[...]                    # (N, tk), native dtype
    if K % tk != 0:
        blk = _mask_ragged(blk, k, tk, K)

    acc_ref[...] += lax.dot_general(
        blk, blk,
        dimension_numbers=(((1,), (1,)), ((), ())),
        preferred_element_type=jnp.float32,
    )

    @pl.when(k == pl.num_programs(0) - 1)
    def _():
        diff = acc_ref[...] * inv_total - t_ref[...]
        loss_ref[...] = (jnp.sum(diff * diff) * inv_n2).reshape(1, 1)


def _gram_mse_call(feats, target_gram, N, K, tk, inv_total, vmem_limit,
                   single_buffer_target):
    if single_buffer_target:
        # Invariant block (constant index_map): fetched once, double-buffering
        # it is pure VMEM waste.
        t_spec = pl.BlockSpec((N, N), lambda k: (0, 0),
                              pipeline_mode=pl.Buffered(1))
    else:
        t_spec = pl.BlockSpec((N, N), lambda k: (0, 0))

    kernel = functools.partial(
        _gram_mse_kernel, inv_total=inv_total, inv_n2=1.0 / float(N * N),
        K=K, tk=tk)
    return pl.pallas_call(
        kernel,
        out_shape=jax.ShapeDtypeStruct((1, 1), jnp.float32),
        grid_spec=pltpu.PrefetchScalarGridSpec(
            num_scalar_prefetch=0,
            grid=(pl.cdiv(K, tk),),
            in_specs=[
                pl.BlockSpec((N, tk), lambda k: (0, k)),   # streamed F tiles
                t_spec,                                    # resident target G
            ],
            out_specs=pl.BlockSpec((1, 1), lambda k: (0, 0)),
            scratch_shapes=[pltpu.VMEM((N, N), jnp.float32)],
        ),
        compiler_params=pltpu.CompilerParams(
            dimension_semantics=("arbitrary",),
            vmem_limit_bytes=vmem_limit,
        ),
    )(feats, target_gram)


def gram_mse_loss(x: jax.Array, target_gram: jax.Array) -> jax.Array:
    feats, N, K, inv_total = _flatten_feats(x)
    tile_budget, vmem_limit = _vmem_budget()
    # Resident: f32 scratch accumulator + (conservatively double-buffered)
    # f32 target block; (1,1) loss output is negligible.
    resident = 3 * N * N * 4
    tk = _pick_tile(N, K, feats.dtype.itemsize, resident, tile_budget)

    target_gram = target_gram.astype(jnp.float32)
    try:
        loss = _gram_mse_call(feats, target_gram, N, K, tk, inv_total,
                              vmem_limit, single_buffer_target=True)
    except Exception:
        # pipeline_mode=Buffered(1) not supported by this jax build: fall back
        # to the default double-buffered target block (known-good config).
        loss = _gram_mse_call(feats, target_gram, N, K, tk, inv_total,
                              vmem_limit, single_buffer_target=False)
    return loss[0, 0]


# ----------------------------------------------------------------------------
# StyleLoss module equivalent.
# ----------------------------------------------------------------------------
class StyleLoss:
    def __init__(self, target_feature: jax.Array):
        # Target Gram computed once (detach is implicit: no grad tracking here).
        self.target = gram_matrix(target_feature)
        self.loss = None

    def __call__(self, x: jax.Array):
        # Fused single-kernel forward: loss computed without materializing G.
        self.loss = gram_mse_loss(x, self.target)
        return x  # torch forward returns `input`; loss stored as attribute


if __name__ == "__main__":
    key = jax.random.PRNGKey(0)
    k_tgt, k_in = jax.random.split(key)

    # NCHW: a=2, b=4, c=16, d=16  ->  N = 8, K = 256
    target_feature = jax.random.normal(k_tgt, (2, 4, 16, 16), dtype=jnp.float32)
    x = jax.random.normal(k_in, (2, 4, 16, 16), dtype=jnp.float32)

    style = StyleLoss(target_feature)
    out = style(x)
    out = jax.block_until_ready(out)
    loss = jax.block_until_ready(style.loss)

    # Reference check in plain JAX (same semantics as the torch module).
    def gram_ref(t):
        a, b, c, d = t.shape
        f = t.reshape(a * b, c * d).astype(jnp.float32)
        return (f @ f.T) / (a * b * c * d)

    G_ref = gram_ref(x)
    T_ref = gram_ref(target_feature)
    loss_ref = jnp.mean((G_ref - T_ref) ** 2)

    assert out.shape == x.shape
    assert jnp.allclose(out, x)
    assert jnp.allclose(loss, loss_ref, rtol=1e-5, atol=1e-6), (loss, loss_ref)
    assert jnp.allclose(style.target, T_ref, rtol=1e-5, atol=1e-6)

    print("KERNEL_OK")
</pallas_src>

<mosaic_0001>
module attributes {stable_mosaic.version = 11 : i64} {
  func.func @_gram_kernel(%arg0: i32, %arg1: memref<8x256xf32, #tpu.memory_space<vmem>>, %arg2: memref<8x8xf32, #tpu.memory_space<vmem>>) attributes {dimension_semantics = [#tpu.dimension_semantics<arbitrary>], iteration_bounds = array<i64: 1>, scalar_prefetch = 0 : i64, scratch_operands = 0 : i64, tpu.core_type = #tpu.core_type<tc>, window_params = [{transform_indices = @transform_0, window_bounds = array<i64: 8, 256>}, {pipeline_mode = #tpu.pipeline_mode<synchronous>, transform_indices = @transform_1, window_bounds = array<i64: 8, 8>}]} {
    %c0_i32 = arith.constant 0 : i32
    %0 = arith.cmpi eq, %arg0, %c0_i32 : i32
    %1 = arith.extui %0 : i1 to i32
    %c0_i32_0 = arith.constant 0 : i32
    %2 = arith.cmpi ne, %1, %c0_i32_0 : i32
    scf.if %2 {
      %cst_8 = arith.constant 0.000000e+00 : f32
      %11 = vector.broadcast %cst_8 : f32 to vector<8x8xf32>
      %c0_9 = arith.constant 0 : index
      %c0_10 = arith.constant 0 : index
      %12 = vector.load %arg2[%c0_9, %c0_10] : memref<8x8xf32, #tpu.memory_space<vmem>>, vector<8x8xf32>
      tpu.vector_store %arg2[%c0_9, %c0_10], %11 {strides = array<i32>} : memref<8x8xf32, #tpu.memory_space<vmem>>, vector<8x8xf32>,
    } else {
    }
    %c0 = arith.constant 0 : index
    %c0_1 = arith.constant 0 : index
    %3 = vector.load %arg1[%c0, %c0_1] : memref<8x256xf32, #tpu.memory_space<vmem>>, vector<8x256xf32>
    %c0_2 = arith.constant 0 : index
    %c0_3 = arith.constant 0 : index
    %4 = vector.load %arg2[%c0_2, %c0_3] : memref<8x8xf32, #tpu.memory_space<vmem>>, vector<8x8xf32>
    %cst = arith.constant dense<0.000000e+00> : vector<8x8xf32>
    %5 = tpu.matmul %3, %3, %cst {dimension_numbers = #tpu.dot_dimension_numbers<[1], [1], [0], [0], [0, 0, 1, 0], [], []>} : vector<8x256xf32>, vector<8x256xf32>, vector<8x8xf32> -> vector<8x8xf32>
    %6 = arith.addf %4, %5 : vector<8x8xf32>
    %c0_4 = arith.constant 0 : index
    %c0_5 = arith.constant 0 : index
    %7 = vector.load %arg2[%c0_4, %c0_5] : memref<8x8xf32, #tpu.memory_space<vmem>>, vector<8x8xf32>
    tpu.vector_store %arg2[%c0_4, %c0_5], %6 {strides = array<i32>} : memref<8x8xf32, #tpu.memory_space<vmem>>, vector<8x8xf32>,
    %c0_i32_6 = arith.constant 0 : i32
    %8 = arith.cmpi eq, %arg0, %c0_i32_6 : i32
    %9 = arith.extui %8 : i1 to i32
    %c0_i32_7 = arith.constant 0 : i32
    %10 = arith.cmpi ne, %9, %c0_i32_7 : i32
    scf.if %10 {
      %c0_8 = arith.constant 0 : index
      %c0_9 = arith.constant 0 : index
      %11 = vector.load %arg2[%c0_8, %c0_9] : memref<8x8xf32, #tpu.memory_space<vmem>>, vector<8x8xf32>
      %cst_10 = arith.constant 4.8828125E-4 : f32
      %12 = vector.broadcast %cst_10 : f32 to vector<8x8xf32>
      %13 = arith.mulf %11, %12 : vector<8x8xf32>
      %c0_11 = arith.constant 0 : index
      %c0_12 = arith.constant 0 : index
      %14 = vector.load %arg2[%c0_11, %c0_12] : memref<8x8xf32, #tpu.memory_space<vmem>>, vector<8x8xf32>
      tpu.vector_store %arg2[%c0_11, %c0_12], %13 {strides = array<i32>} : memref<8x8xf32, #tpu.memory_space<vmem>>, vector<8x8xf32>,
    } else {
    }
    return
  }
  func.func @transform_0(%arg0: i32) -> (i32, i32) {
    %c0_i32 = arith.constant 0 : i32
    %c0_i32_0 = arith.constant 0 : i32
    return %c0_i32, %arg0 : i32, i32
  }
  func.func @transform_1(%arg0: i32) -> (i32, i32) {
    %c0_i32 = arith.constant 0 : i32
    %c0_i32_0 = arith.constant 0 : i32
    %c0_i32_1 = arith.constant 0 : i32
    return %c0_i32, %c0_i32_0 : i32, i32
  }
}

</mosaic_0001>

<llo_original>
// kernel: tpu_custom_call.1
$region0: #{tpu_custom_call.1}
  #allocation0 [shape = 'u32[]', space=smem, size = 0x4, offset = 0x4, fixed_abs, tag = 'smem constant byte address 0x4 - core index']
  #allocation1 [shape = 'u32[144,128]{1,0:T(1,128)}', space=vmem, size = 0x12000, scoped, tag = 'internal scratch']
  %s0 = inlined_call_operand.hbm [shape: f32[8,256], index: 0, kind: input, shape index: {}]
  %s1 = inlined_call_operand.hbm [shape: f32[8,8], index: 1, kind: output, shape index: {}]
  %s2 = sld [smem:[#allocation0]]
  $region26: #{tpu_custom_call.1} parent=0
    _
  %s4 = ssub.s32 1, %s2
  %s5 = scalar_select 0, %s4, %s2
  $region1: #{tpu_custom_call.1} parent=0
    #allocation2 [shape = 'u8[8192]{0}', space=vmem, size = 0x2000, scoped, tag = 'input window, operand 0, single buffered']
    #allocation3 [shape = 's32[1]{0}', space=sflag, size = 0x4, scoped, tag = 'scoped memory for tpu_custom_call.1']
    #allocation4 [shape = 's32[1]{0}', space=sflag, size = 0x4, scoped, tag = 'scoped memory for tpu_custom_call.1']
    #allocation5 [shape = 'u8[4096]{0}', space=vmem, size = 0x1000, scoped, tag = 'output window, operand 0, single buffered']
    %6 = vsyncpa [#allocation3], 0
    %7 = vsyncpa [#allocation4], 0
    // Predicated region
    $region2: #{tpu_custom_call.1} parent=1 // pred_check
      _
    $region3: #{tpu_custom_call.1} parent=1 // pred_check_branch
      %9 = sbr.rel (0) target = $region5
    $region4: #{tpu_custom_call.1} parent=1 // pred_region
      %s11 = ssub.s32 256, 256
      %12 = vsyncadd [#allocation3], %s11
      %s14 = sshll.u32 [#allocation2], 4
      %s15 = int_to_ptr.vmem [resolvable:$true] %s14
      %17 = dma.hbm_to_vmem [thread:$0]  %s0, 256, %s15, [#allocation3]
    $region5: #{tpu_custom_call.1} parent=1 // pred_fallthru
      _
    // Predicated region
    $region6: #{tpu_custom_call.1} parent=1 // pred_check
      _
    $region7: #{tpu_custom_call.1} parent=1 // pred_check_branch
      %19 = sbr.rel (0) target = $region9
    $region8: #{tpu_custom_call.1} parent=1 // pred_region
      %20 = dma.done [#allocation3], 256
    $region9: #{tpu_custom_call.1} parent=1 // pred_fallthru
      _
    %p21 = scmp.eq.s32.totalorder 0, 0
    // Predicated region
    $region10: #{tpu_custom_call.1} parent=1 // pred_check
      %p22 = pneg %p21
    $region11: #{tpu_custom_call.1} parent=1 // pred_check_branch
      %24 = sbr.rel (%p22) target = $region13
    $region12: #{tpu_custom_call.1} parent=1 // pred_region
      %vm25 = vcmask 64512
      %26 = vst.msk [vmem:[#allocation5] sm:$0xff] %vm25, 0.0
    $region13: #{tpu_custom_call.1} parent=1 // pred_fallthru
      _
    %v27 = vld [vmem:[#allocation2] sm:$0xff]
    %v28 = vld [vmem:[#allocation2 + $0x8] sm:$0xff]
    %v29 = vld [vmem:[#allocation5] sm:$0xff]
    %30 = vmatprep.subr.mxu0 0.0
    %31 = vmatpush1.xpose.msra.mxu0 0.0
    %32 = vmatprep.subr.mxu0 0.0
    %33 = vmatpush1.xpose.msra.mxu0 0.0
    %34 = vmatprep.subr.mxu0 0.0
    %35 = vmatpush1.xpose.msra.mxu0 0.0
    %36 = vmatprep.subr.mxu0 0.0
    %37 = vmatpush1.xpose.msra.mxu0 0.0
    %38 = vmatprep.subr.mxu0 0.0
    %39 = vmatpush1.xpose.msra.mxu0 0.0
    %40 = vmatprep.subr.mxu0 0.0
    %41 = vmatpush1.xpose.msra.mxu0 0.0
    %42 = vmatprep.subr.mxu0 0.0
    %43 = vmatpush1.xpose.msra.mxu0 0.0
    %44 = vmatprep.subr.mxu0 0.0
    %45 = vmatpush1.xpose.msra.mxu0 0.0
    %46 = vmatprep.subr.mxu0 0.0
    %47 = vmatpush1.xpose.msra.mxu0 0.0
    %48 = vmatprep.subr.mxu0 0.0
    %49 = vmatpush1.xpose.msra.mxu0 0.0
    %50 = vmatprep.subr.mxu0 0.0
    %51 = vmatpush1.xpose.msra.mxu0 0.0
    %52 = vmatprep.subr.mxu0 0.0
    %53 = vmatpush1.xpose.msra.mxu0 0.0
    %54 = vmatprep.subr.mxu0 0.0
    %55 = vmatpush1.xpose.msra.mxu0 0.0
    %56 = vmatprep.subr.mxu0 0.0
    %57 = vmatpush1.xpose.msra.mxu0 0.0
    %58 = vmatprep.subr.mxu0 0.0
    %59 = vmatpush1.xpose.msra.mxu0 0.0
    %60 = vmatprep.subr.mxu0 %v28
    %61 = vmatpush1.xpose.msra.mxu0 %v27
    %62 = vmatprep.subr.mxu0 0.0
    %63 = vmatpush2.xpose.msra.mxu0 0.0
    %64 = vmatprep.subr.mxu0 0.0
    %65 = vmatpush2.xpose.msra.mxu0 0.0
    %66 = vmatprep.subr.mxu0 0.0
    %67 = vmatpush2.xpose.msra.mxu0 0.0
    %68 = vmatprep.subr.mxu0 0.0
    %69 = vmatpush2.xpose.msra.mxu0 0.0
    %70 = vmatprep.subr.mxu0 0.0
    %71 = vmatpush2.xpose.msra.mxu0 0.0
    %72 = vmatprep.subr.mxu0 0.0
    %73 = vmatpush2.xpose.msra.mxu0 0.0
    %74 = vmatprep.subr.mxu0 0.0
    %75 = vmatpush2.xpose.msra.mxu0 0.0
    %76 = vmatprep.subr.mxu0 0.0
    %77 = vmatpush2.xpose.msra.mxu0 0.0
    %78 = vmatprep.subr.mxu0 0.0
    %79 = vmatpush2.xpose.msra.mxu0 0.0
    %80 = vmatprep.subr.mxu0 0.0
    %81 = vmatpush2.xpose.msra.mxu0 0.0
    %82 = vmatprep.subr.mxu0 0.0
    %83 = vmatpush2.xpose.msra.mxu0 0.0
    %84 = vmatprep.subr.mxu0 0.0
    %85 = vmatpush2.xpose.msra.mxu0 0.0
    %86 = vmatprep.subr.mxu0 0.0
    %87 = vmatpush2.xpose.msra.mxu0 0.0
    %88 = vmatprep.subr.mxu0 0.0
    %89 = vmatpush2.xpose.msra.mxu0 0.0
    %90 = vmatprep.subr.mxu0 0.0
    %91 = vmatpush2.xpose.msra.mxu0 0.0
    %92 = vmatprep.subr.mxu0 0.0
    %93 = vmatpush2.xpose.msra.mxu0 0.0
    %94 = vmatprep.mubr.f32.mxu0 %v28
    %95 = vmatmul.mubr.f32.gmra.mxu0 %v27
    %v96 = vpop.f32.mrf.mxu0
    %v97 = vadd.f32 0.0, %v96
    %v98 = vpop.f32.mrf.mxu0
    %99 = vdwg.mxu0
    %v100 = vadd.f32 %v29, %v97
    %vm101 = vcmask 64512
    %102 = vst.msk [vmem:[#allocation5] sm:$0xff] %vm101, %v100
    // Predicated region
    $region14: #{tpu_custom_call.1} parent=1 // pred_check
      %p103 = pneg %p21
    $region15: #{tpu_custom_call.1} parent=1 // pred_check_branch
      %105 = sbr.rel (%p103) target = $region17
    $region16: #{tpu_custom_call.1} parent=1 // pred_region
      %v106 = vld [vmem:[#allocation5] sm:$0xff]
      %v107 = vmul.f32 %v106, 0.00048828125
      %108 = vst.msk [vmem:[#allocation5] sm:$0xff] %vm101, %v107
    $region17: #{tpu_custom_call.1} parent=1 // pred_fallthru
      _
    // Predicated region
    $region18: #{tpu_custom_call.1} parent=1 // pred_check
      _
    $region19: #{tpu_custom_call.1} parent=1 // pred_check_branch
      %110 = sbr.rel (0) target = $region21
    $region20: #{tpu_custom_call.1} parent=1 // pred_region
      %s112 = ssub.s32 128, 128
      %113 = vsyncadd [#allocation4], %s112
      %s115 = sshll.u32 [#allocation5], 4
      %s116 = int_to_ptr.vmem [resolvable:$true] %s115
      %118 = dma.vmem_to_hbm [thread:$0]  %s116, 128, %s1, [#allocation4]
    $region21: #{tpu_custom_call.1} parent=1 // pred_fallthru
      _
    // Predicated region
    $region22: #{tpu_custom_call.1} parent=1 // pred_check
      _
    $region23: #{tpu_custom_call.1} parent=1 // pred_check_branch
      %120 = sbr.rel (0) target = $region25
    $region24: #{tpu_custom_call.1} parent=1 // pred_region
      %121 = dma.done [#allocation4], 128
    $region25: #{tpu_custom_call.1} parent=1 // pred_fallthru
      _
    %122 = vsyncpa [#allocation3], 1
    %123 = vsyncpa [#allocation4], 1

</llo_original>
